<compile_context>
chip_gen: v6e
topology: v6e:2x2x1
jax: 0.10.0
libtpu: 0.0.40
codegen_flags: <defaults>
</compile_context>

<pallas_src>
import jax
import jax.numpy as jnp
from jax import lax
from jax.experimental import pallas as pl
from jax.experimental.pallas import tpu as pltpu


def lstm_double_attention_kernel(
    x_ref,      # (B*S, Din)  flattened input
    wsc_ref,    # (1, Din)    folded attention-score weight  wa @ We
    wxg_ref,    # (Din, 4H)   folded input->gate weight      We^T @ W_ih^T
    bxg_ref,    # (1, 4H)     folded gate bias  be @ W_ih^T + b_ih + b_hh
    whh_ref,    # (H, 4H)     LSTM W_hh^T, gate order (i,f,g,o) along columns
    wfc_ref,    # (H, Dout)   fc weight^T
    bfc_ref,    # (1, Dout)   fc bias
    out_ref,    # (B, Dout)   output
):
    BS, Din = x_ref.shape
    B, Dout = out_ref.shape
    S = BS // B
    H = whh_ref.shape[0]

    x = x_ref[...]                                   # (B*S, Din)
    x3 = x.reshape(B, S, Din)                        # leading-dim split only

    # ---- attention scores + softmax over S (off the serial path) ----------
    # Multiply-reduce on the raw (B,S,Din) input (Din is tiny) rather than a
    # (Din,1) matmul: avoids an awkward (B*S,1)->(B,S) relayout, and the
    # reduce sits in a spare XLU slot during the prologue.
    scores = jnp.sum(x3 * wsc_ref[...], axis=-1)                       # (B, S)
    m = jnp.max(scores, axis=-1, keepdims=True)                        # (B, 1)
    p = jnp.exp(scores - m)                                            # (B, S)
    w = p / jnp.sum(p, axis=-1, keepdims=True)                         # (B, S)  exact

    # ---- folded, lane-dense input->gate pre-activation --------------------
    # xg[b] = sum_s w[b,s] * (x[b,s] @ Wxg) + bxg   (single (B*S,Din)@(Din,4H))
    xg_all = jnp.dot(x, wxg_ref[...],
                     preferred_element_type=jnp.float32)               # (B*S, 4H)
    xg3 = xg_all.reshape(B, S, 4 * H)
    xg = jnp.sum(xg3 * w[:, :, None], axis=1) + bxg_ref[...]           # (B, 4H)

    # ---- LSTM recurrence over the batch axis (PyTorch 2-D LSTM quirk) -----
    whh = whh_ref[...]                                                 # hoist (H, 4H)
    row_ids = lax.broadcasted_iota(jnp.int32, (B, H), 0)               # (B, H)

    h = jnp.zeros((1, H), jnp.float32)
    c = jnp.zeros((1, H), jnp.float32)
    hs = jnp.zeros((B, H), jnp.float32)                                # register value

    # Static full unroll is fine at B=4; xg[t:t+1] is a free static slice.
    # TODO(synk): cap the unroll (e.g. blocks of 8) if B grows large.
    for t in range(B):
        z = xg[t:t + 1, :] + jnp.dot(h, whh,
                                     preferred_element_type=jnp.float32)   # (1, 4H)
        sig = 0.5 * (jnp.tanh(0.5 * z) + 1.0)    # full-width sigmoid-via-tanh (EUP)
        tnh = jnp.tanh(z)                        # full-width tanh            (EUP)
        i = sig[:, 0 * H:1 * H]
        f = sig[:, 1 * H:2 * H]
        g = tnh[:, 2 * H:3 * H]
        o = sig[:, 3 * H:4 * H]
        c = f * c + i * g
        h = o * jnp.tanh(c)
        hs = jnp.where(row_ids == t, h, hs)      # register accumulate, no vst

    # ---- fc projection: one batched matmul + one full store ---------------
    out_ref[...] = (jnp.dot(hs, wfc_ref[...],
                            preferred_element_type=jnp.float32) + bfc_ref[...])


def lstm_double_attention_forward(x, params):
    B, S, Din = x.shape
    E = params["we"].shape[0]
    H = params["w_hh"].shape[1]
    Dout = params["wfc"].shape[0]

    x2 = x.reshape(B * S, Din)                                    # free in XLA

    # --- trace-time algebraic folds (tiny matmuls, run once in XLA) --------
    we_t = params["we"].T                                         # (Din, E)
    wih_t = params["w_ih"].T                                      # (E, 4H) i,f,g,o
    wsc = (params["wa"] @ params["we"]).reshape(1, Din)           # (1, Din)
    wxg = we_t @ wih_t                                            # (Din, 4H)
    bxg = (params["be"].reshape(1, E) @ wih_t
           + (params["b_ih"] + params["b_hh"]).reshape(1, 4 * H)) # (1, 4H)
    whh_t = params["w_hh"].T                                      # (H, 4H)
    wfc_t = params["wfc"].T                                       # (H, Dout)
    bfc = params["bfc"].reshape(1, Dout)                          # (1, Dout)

    return pl.pallas_call(
        lstm_double_attention_kernel,
        out_shape=jax.ShapeDtypeStruct((B, Dout), jnp.float32),
        in_specs=[pl.BlockSpec(memory_space=pltpu.MemorySpace.VMEM)] * 7,
        out_specs=pl.BlockSpec(memory_space=pltpu.MemorySpace.VMEM),
    )(x2, wsc, wxg, bxg, whh_t, wfc_t, bfc)


def reference_forward(x, params):
    """Pure-JAX reference matching the PyTorch forward semantics."""
    emb = jnp.einsum("bsd,ed->bse", x, params["we"]) + params["be"]
    scores = jnp.einsum("bse,e->bs", emb, params["wa"][0])
    w = jax.nn.softmax(scores, axis=1)
    att = jnp.sum(emb * w[..., None], axis=1)                    # (B, E)
    H = params["w_hh"].shape[1]
    h = jnp.zeros((H,), jnp.float32)
    c = jnp.zeros((H,), jnp.float32)
    outs = []
    for t in range(att.shape[0]):
        z = (params["w_ih"] @ att[t] + params["b_ih"]
             + params["w_hh"] @ h + params["b_hh"])
        i = jax.nn.sigmoid(z[0:H])
        f = jax.nn.sigmoid(z[H:2 * H])
        g = jnp.tanh(z[2 * H:3 * H])
        o = jax.nn.sigmoid(z[3 * H:4 * H])
        c = f * c + i * g
        h = o * jnp.tanh(c)
        outs.append(params["wfc"] @ h + params["bfc"])
    return jnp.stack(outs, axis=0)


def make_params(key, input_dim, embed_dim, hidden_dim, output_dim):
    ks = jax.random.split(key, 9)
    s = 0.1
    return dict(
        we=jax.random.normal(ks[0], (embed_dim, input_dim), jnp.float32) * s,
        be=jax.random.normal(ks[1], (embed_dim,), jnp.float32) * s,
        wa=jax.random.normal(ks[2], (1, embed_dim), jnp.float32) * s,
        w_ih=jax.random.normal(ks[3], (4 * hidden_dim, embed_dim), jnp.float32) * s,
        w_hh=jax.random.normal(ks[4], (4 * hidden_dim, hidden_dim), jnp.float32) * s,
        b_ih=jax.random.normal(ks[5], (4 * hidden_dim,), jnp.float32) * s,
        b_hh=jax.random.normal(ks[6], (4 * hidden_dim,), jnp.float32) * s,
        wfc=jax.random.normal(ks[7], (output_dim, hidden_dim), jnp.float32) * s,
        bfc=jax.random.normal(ks[8], (output_dim,), jnp.float32) * s,
    )


if __name__ == "__main__":
    B, S, Din, E, H, Dout = 4, 8, 16, 32, 32, 8

    key = jax.random.PRNGKey(0)
    kx, kp = jax.random.split(key)
    x = jax.random.normal(kx, (B, S, Din), jnp.float32)
    params = make_params(kp, Din, E, H, Dout)

    out = lstm_double_attention_forward(x, params)
    out = jax.block_until_ready(out)

    ref = reference_forward(x, params)
    assert out.shape == (B, Dout), out.shape
    # tolerance covers the sigmoid-via-tanh gate math and the trace-time
    # algebraic weight folds (both mathematically exact, slightly different
    # f32 rounding paths than the reference).
    assert jnp.allclose(out, ref, rtol=5e-3, atol=1e-3), (out, ref)

    print("KERNEL_OK")
</pallas_src>

<mosaic_0001>
module attributes {stable_mosaic.version = 11 : i64} {
  func.func @lstm_double_attention_kernel(%arg0: memref<32x16xf32, #tpu.memory_space<vmem>>, %arg1: memref<1x16xf32, #tpu.memory_space<vmem>>, %arg2: memref<16x128xf32, #tpu.memory_space<vmem>>, %arg3: memref<1x128xf32, #tpu.memory_space<vmem>>, %arg4: memref<32x128xf32, #tpu.memory_space<vmem>>, %arg5: memref<32x8xf32, #tpu.memory_space<vmem>>, %arg6: memref<1x8xf32, #tpu.memory_space<vmem>>, %arg7: memref<4x8xf32, #tpu.memory_space<vmem>>) attributes {dimension_semantics = [], scalar_prefetch = 0 : i64, scratch_operands = 0 : i64, tpu.core_type = #tpu.core_type<tc>} {
    %c0 = arith.constant 0 : index
    %c0_0 = arith.constant 0 : index
    %0 = vector.load %arg0[%c0, %c0_0] : memref<32x16xf32, #tpu.memory_space<vmem>>, vector<32x16xf32>
    %1 = vector.shape_cast %0 : vector<32x16xf32> to vector<4x8x16xf32>
    %c0_1 = arith.constant 0 : index
    %c0_2 = arith.constant 0 : index
    %2 = vector.load %arg1[%c0_1, %c0_2] : memref<1x16xf32, #tpu.memory_space<vmem>>, vector<1x16xf32>
    %3 = vector.shape_cast %2 : vector<1x16xf32> to vector<1x1x16xf32>
    %4 = vector.broadcast %3 : vector<1x1x16xf32> to vector<4x8x16xf32>
    %5 = arith.mulf %1, %4 : vector<4x8x16xf32>
    %cst = arith.constant dense<0.000000e+00> : vector<4x8xf32>
    %6 = vector.multi_reduction <add>, %5, %cst [2] : vector<4x8x16xf32> to vector<4x8xf32>
    %cst_3 = arith.constant dense<0xFF800000> : vector<4xf32>
    %7 = vector.multi_reduction <maximumf>, %6, %cst_3 [1] : vector<4x8xf32> to vector<4xf32>
    %8 = vector.shape_cast %7 : vector<4xf32> to vector<4x1xf32>
    %9 = vector.broadcast %8 : vector<4x1xf32> to vector<4x8xf32>
    %10 = arith.subf %6, %9 : vector<4x8xf32>
    %11 = math.exp %10 : vector<4x8xf32>
    %cst_4 = arith.constant dense<0.000000e+00> : vector<4xf32>
    %12 = vector.multi_reduction <add>, %11, %cst_4 [1] : vector<4x8xf32> to vector<4xf32>
    %13 = vector.shape_cast %12 : vector<4xf32> to vector<4x1xf32>
    %14 = vector.broadcast %13 : vector<4x1xf32> to vector<4x8xf32>
    %15 = arith.divf %11, %14 : vector<4x8xf32>
    %c0_5 = arith.constant 0 : index
    %c0_6 = arith.constant 0 : index
    %16 = vector.load %arg2[%c0_5, %c0_6] : memref<16x128xf32, #tpu.memory_space<vmem>>, vector<16x128xf32>
    %cst_7 = arith.constant dense<0.000000e+00> : vector<32x128xf32>
    %17 = tpu.matmul %0, %16, %cst_7 {dimension_numbers = #tpu.dot_dimension_numbers<[1], [0], [0], [1], [0, 0, 1, 1], [], []>} : vector<32x16xf32>, vector<16x128xf32>, vector<32x128xf32> -> vector<32x128xf32>
    %18 = vector.shape_cast %17 : vector<32x128xf32> to vector<4x8x128xf32>
    %19 = vector.shape_cast %15 : vector<4x8xf32> to vector<4x8x1xf32>
    %20 = vector.broadcast %19 : vector<4x8x1xf32> to vector<4x8x128xf32>
    %21 = arith.mulf %18, %20 : vector<4x8x128xf32>
    %cst_8 = arith.constant dense<0.000000e+00> : vector<4x128xf32>
    %22 = vector.multi_reduction <add>, %21, %cst_8 [1] : vector<4x8x128xf32> to vector<4x128xf32>
    %c0_9 = arith.constant 0 : index
    %c0_10 = arith.constant 0 : index
    %23 = vector.load %arg3[%c0_9, %c0_10] : memref<1x128xf32, #tpu.memory_space<vmem>>, vector<1x128xf32>
    %24 = vector.broadcast %23 : vector<1x128xf32> to vector<4x128xf32>
    %25 = arith.addf %22, %24 : vector<4x128xf32>
    %c0_11 = arith.constant 0 : index
    %c0_12 = arith.constant 0 : index
    %26 = vector.load %arg4[%c0_11, %c0_12] : memref<32x128xf32, #tpu.memory_space<vmem>>, vector<32x128xf32>
    %27 = tpu.iota {dimensions = array<i32: 0>} : vector<4x32xi32>
    %cst_13 = arith.constant 0.000000e+00 : f32
    %28 = vector.broadcast %cst_13 : f32 to vector<1x32xf32>
    %cst_14 = arith.constant 0.000000e+00 : f32
    %29 = vector.broadcast %cst_14 : f32 to vector<1x32xf32>
    %cst_15 = arith.constant 0.000000e+00 : f32
    %30 = vector.broadcast %cst_15 : f32 to vector<4x32xf32>
    %31 = vector.extract_strided_slice %25 {offsets = [0, 0], sizes = [1, 128], strides = [1, 1]} : vector<4x128xf32> to vector<1x128xf32>
    %cst_16 = arith.constant dense<0.000000e+00> : vector<1x128xf32>
    %32 = tpu.matmul %28, %26, %cst_16 {dimension_numbers = #tpu.dot_dimension_numbers<[1], [0], [0], [1], [0, 0, 1, 1], [], []>} : vector<1x32xf32>, vector<32x128xf32>, vector<1x128xf32> -> vector<1x128xf32>
    %33 = arith.addf %31, %32 : vector<1x128xf32>
    %cst_17 = arith.constant 5.000000e-01 : f32
    %34 = vector.broadcast %cst_17 : f32 to vector<1x128xf32>
    %35 = arith.mulf %34, %33 : vector<1x128xf32>
    %36 = math.tanh %35 : vector<1x128xf32>
    %cst_18 = arith.constant 1.000000e+00 : f32
    %37 = vector.broadcast %cst_18 : f32 to vector<1x128xf32>
    %38 = arith.addf %36, %37 : vector<1x128xf32>
    %cst_19 = arith.constant 5.000000e-01 : f32
    %39 = vector.broadcast %cst_19 : f32 to vector<1x128xf32>
    %40 = arith.mulf %39, %38 : vector<1x128xf32>
    %41 = math.tanh %33 : vector<1x128xf32>
    %42 = vector.extract_strided_slice %40 {offsets = [0, 0], sizes = [1, 32], strides = [1, 1]} : vector<1x128xf32> to vector<1x32xf32>
    %43 = vector.extract_strided_slice %40 {offsets = [0, 32], sizes = [1, 32], strides = [1, 1]} : vector<1x128xf32> to vector<1x32xf32>
    %44 = vector.extract_strided_slice %41 {offsets = [0, 64], sizes = [1, 32], strides = [1, 1]} : vector<1x128xf32> to vector<1x32xf32>
    %45 = vector.extract_strided_slice %40 {offsets = [0, 96], sizes = [1, 32], strides = [1, 1]} : vector<1x128xf32> to vector<1x32xf32>
    %46 = arith.mulf %43, %29 : vector<1x32xf32>
    %47 = arith.mulf %42, %44 : vector<1x32xf32>
    %48 = arith.addf %46, %47 : vector<1x32xf32>
    %49 = math.tanh %48 : vector<1x32xf32>
    %50 = arith.mulf %45, %49 : vector<1x32xf32>
    %c0_i32 = arith.constant 0 : i32
    %51 = vector.broadcast %c0_i32 : i32 to vector<4x32xi32>
    %52 = arith.cmpi eq, %27, %51 : vector<4x32xi32>
    %53 = vector.shape_cast %50 : vector<1x32xf32> to vector<1x32xf32>
    %54 = vector.broadcast %53 : vector<1x32xf32> to vector<4x32xf32>
    %55 = arith.select %52, %54, %30 : vector<4x32xi1>, vector<4x32xf32>
    %56 = vector.extract_strided_slice %25 {offsets = [1, 0], sizes = [1, 128], strides = [1, 1]} : vector<4x128xf32> to vector<1x128xf32>
    %cst_20 = arith.constant dense<0.000000e+00> : vector<1x128xf32>
    %57 = tpu.matmul %50, %26, %cst_20 {dimension_numbers = #tpu.dot_dimension_numbers<[1], [0], [0], [1], [0, 0, 1, 1], [], []>} : vector<1x32xf32>, vector<32x128xf32>, vector<1x128xf32> -> vector<1x128xf32>
    %58 = arith.addf %56, %57 : vector<1x128xf32>
    %cst_21 = arith.constant 5.000000e-01 : f32
    %59 = vector.broadcast %cst_21 : f32 to vector<1x128xf32>
    %60 = arith.mulf %59, %58 : vector<1x128xf32>
    %61 = math.tanh %60 : vector<1x128xf32>
    %cst_22 = arith.constant 1.000000e+00 : f32
    %62 = vector.broadcast %cst_22 : f32 to vector<1x128xf32>
    %63 = arith.addf %61, %62 : vector<1x128xf32>
    %cst_23 = arith.constant 5.000000e-01 : f32
    %64 = vector.broadcast %cst_23 : f32 to vector<1x128xf32>
    %65 = arith.mulf %64, %63 : vector<1x128xf32>
    %66 = math.tanh %58 : vector<1x128xf32>
    %67 = vector.extract_strided_slice %65 {offsets = [0, 0], sizes = [1, 32], strides = [1, 1]} : vector<1x128xf32> to vector<1x32xf32>
    %68 = vector.extract_strided_slice %65 {offsets = [0, 32], sizes = [1, 32], strides = [1, 1]} : vector<1x128xf32> to vector<1x32xf32>
    %69 = vector.extract_strided_slice %66 {offsets = [0, 64], sizes = [1, 32], strides = [1, 1]} : vector<1x128xf32> to vector<1x32xf32>
    %70 = vector.extract_strided_slice %65 {offsets = [0, 96], sizes = [1, 32], strides = [1, 1]} : vector<1x128xf32> to vector<1x32xf32>
    %71 = arith.mulf %68, %48 : vector<1x32xf32>
    %72 = arith.mulf %67, %69 : vector<1x32xf32>
    %73 = arith.addf %71, %72 : vector<1x32xf32>
    %74 = math.tanh %73 : vector<1x32xf32>
    %75 = arith.mulf %70, %74 : vector<1x32xf32>
    %c1_i32 = arith.constant 1 : i32
    %76 = vector.broadcast %c1_i32 : i32 to vector<4x32xi32>
    %77 = arith.cmpi eq, %27, %76 : vector<4x32xi32>
    %78 = vector.shape_cast %75 : vector<1x32xf32> to vector<1x32xf32>
    %79 = vector.broadcast %78 : vector<1x32xf32> to vector<4x32xf32>
    %80 = arith.select %77, %79, %55 : vector<4x32xi1>, vector<4x32xf32>
    %81 = vector.extract_strided_slice %25 {offsets = [2, 0], sizes = [1, 128], strides = [1, 1]} : vector<4x128xf32> to vector<1x128xf32>
    %cst_24 = arith.constant dense<0.000000e+00> : vector<1x128xf32>
    %82 = tpu.matmul %75, %26, %cst_24 {dimension_numbers = #tpu.dot_dimension_numbers<[1], [0], [0], [1], [0, 0, 1, 1], [], []>} : vector<1x32xf32>, vector<32x128xf32>, vector<1x128xf32> -> vector<1x128xf32>
    %83 = arith.addf %81, %82 : vector<1x128xf32>
    %cst_25 = arith.constant 5.000000e-01 : f32
    %84 = vector.broadcast %cst_25 : f32 to vector<1x128xf32>
    %85 = arith.mulf %84, %83 : vector<1x128xf32>
    %86 = math.tanh %85 : vector<1x128xf32>
    %cst_26 = arith.constant 1.000000e+00 : f32
    %87 = vector.broadcast %cst_26 : f32 to vector<1x128xf32>
    %88 = arith.addf %86, %87 : vector<1x128xf32>
    %cst_27 = arith.constant 5.000000e-01 : f32
    %89 = vector.broadcast %cst_27 : f32 to vector<1x128xf32>
    %90 = arith.mulf %89, %88 : vector<1x128xf32>
    %91 = math.tanh %83 : vector<1x128xf32>
    %92 = vector.extract_strided_slice %90 {offsets = [0, 0], sizes = [1, 32], strides = [1, 1]} : vector<1x128xf32> to vector<1x32xf32>
    %93 = vector.extract_strided_slice %90 {offsets = [0, 32], sizes = [1, 32], strides = [1, 1]} : vector<1x128xf32> to vector<1x32xf32>
    %94 = vector.extract_strided_slice %91 {offsets = [0, 64], sizes = [1, 32], strides = [1, 1]} : vector<1x128xf32> to vector<1x32xf32>
    %95 = vector.extract_strided_slice %90 {offsets = [0, 96], sizes = [1, 32], strides = [1, 1]} : vector<1x128xf32> to vector<1x32xf32>
    %96 = arith.mulf %93, %73 : vector<1x32xf32>
    %97 = arith.mulf %92, %94 : vector<1x32xf32>
    %98 = arith.addf %96, %97 : vector<1x32xf32>
    %99 = math.tanh %98 : vector<1x32xf32>
    %100 = arith.mulf %95, %99 : vector<1x32xf32>
    %c2_i32 = arith.constant 2 : i32
    %101 = vector.broadcast %c2_i32 : i32 to vector<4x32xi32>
    %102 = arith.cmpi eq, %27, %101 : vector<4x32xi32>
    %103 = vector.shape_cast %100 : vector<1x32xf32> to vector<1x32xf32>
    %104 = vector.broadcast %103 : vector<1x32xf32> to vector<4x32xf32>
    %105 = arith.select %102, %104, %80 : vector<4x32xi1>, vector<4x32xf32>
    %106 = vector.extract_strided_slice %25 {offsets = [3, 0], sizes = [1, 128], strides = [1, 1]} : vector<4x128xf32> to vector<1x128xf32>
    %cst_28 = arith.constant dense<0.000000e+00> : vector<1x128xf32>
    %107 = tpu.matmul %100, %26, %cst_28 {dimension_numbers = #tpu.dot_dimension_numbers<[1], [0], [0], [1], [0, 0, 1, 1], [], []>} : vector<1x32xf32>, vector<32x128xf32>, vector<1x128xf32> -> vector<1x128xf32>
    %108 = arith.addf %106, %107 : vector<1x128xf32>
    %cst_29 = arith.constant 5.000000e-01 : f32
    %109 = vector.broadcast %cst_29 : f32 to vector<1x128xf32>
    %110 = arith.mulf %109, %108 : vector<1x128xf32>
    %111 = math.tanh %110 : vector<1x128xf32>
    %cst_30 = arith.constant 1.000000e+00 : f32
    %112 = vector.broadcast %cst_30 : f32 to vector<1x128xf32>
    %113 = arith.addf %111, %112 : vector<1x128xf32>
    %cst_31 = arith.constant 5.000000e-01 : f32
    %114 = vector.broadcast %cst_31 : f32 to vector<1x128xf32>
    %115 = arith.mulf %114, %113 : vector<1x128xf32>
    %116 = math.tanh %108 : vector<1x128xf32>
    %117 = vector.extract_strided_slice %115 {offsets = [0, 0], sizes = [1, 32], strides = [1, 1]} : vector<1x128xf32> to vector<1x32xf32>
    %118 = vector.extract_strided_slice %115 {offsets = [0, 32], sizes = [1, 32], strides = [1, 1]} : vector<1x128xf32> to vector<1x32xf32>
    %119 = vector.extract_strided_slice %116 {offsets = [0, 64], sizes = [1, 32], strides = [1, 1]} : vector<1x128xf32> to vector<1x32xf32>
    %120 = vector.extract_strided_slice %115 {offsets = [0, 96], sizes = [1, 32], strides = [1, 1]} : vector<1x128xf32> to vector<1x32xf32>
    %121 = arith.mulf %118, %98 : vector<1x32xf32>
    %122 = arith.mulf %117, %119 : vector<1x32xf32>
    %123 = arith.addf %121, %122 : vector<1x32xf32>
    %124 = math.tanh %123 : vector<1x32xf32>
    %125 = arith.mulf %120, %124 : vector<1x32xf32>
    %c3_i32 = arith.constant 3 : i32
    %126 = vector.broadcast %c3_i32 : i32 to vector<4x32xi32>
    %127 = arith.cmpi eq, %27, %126 : vector<4x32xi32>
    %128 = vector.shape_cast %125 : vector<1x32xf32> to vector<1x32xf32>
    %129 = vector.broadcast %128 : vector<1x32xf32> to vector<4x32xf32>
    %130 = arith.select %127, %129, %105 : vector<4x32xi1>, vector<4x32xf32>
    %c0_32 = arith.constant 0 : index
    %c0_33 = arith.constant 0 : index
    %131 = vector.load %arg5[%c0_32, %c0_33] : memref<32x8xf32, #tpu.memory_space<vmem>>, vector<32x8xf32>
    %cst_34 = arith.constant dense<0.000000e+00> : vector<4x8xf32>
    %132 = tpu.matmul %130, %131, %cst_34 {dimension_numbers = #tpu.dot_dimension_numbers<[1], [0], [0], [1], [0, 0, 1, 1], [], []>} : vector<4x32xf32>, vector<32x8xf32>, vector<4x8xf32> -> vector<4x8xf32>
    %c0_35 = arith.constant 0 : index
    %c0_36 = arith.constant 0 : index
    %133 = vector.load %arg6[%c0_35, %c0_36] : memref<1x8xf32, #tpu.memory_space<vmem>>, vector<1x8xf32>
    %134 = vector.broadcast %133 : vector<1x8xf32> to vector<4x8xf32>
    %135 = arith.addf %132, %134 : vector<4x8xf32>
    %c0_37 = arith.constant 0 : index
    %c0_38 = arith.constant 0 : index
    %136 = vector.load %arg7[%c0_37, %c0_38] : memref<4x8xf32, #tpu.memory_space<vmem>>, vector<4x8xf32>
    tpu.vector_store %arg7[%c0_37, %c0_38], %135 {strides = array<i32>} : memref<4x8xf32, #tpu.memory_space<vmem>>, vector<4x8xf32>,
    return
  }
}

</mosaic_0001>

<llo_original>
// kernel: tpu_custom_call.1
$region0: #{tpu_custom_call.1}
  #allocation0 [shape = 'u32[]', space=smem, size = 0x4, offset = 0x4, fixed_abs, tag = 'smem constant byte address 0x4 - core index']
  #allocation1 [shape = 'u32[144,128]{1,0:T(1,128)}', space=vmem, size = 0x12000, scoped, tag = 'internal scratch']
  %s0 = inlined_call_operand.vmem [shape: f32[32,16], index: 0, kind: input, shape index: {}]
  %s1 = inlined_call_operand.vmem [shape: f32[1,16], index: 1, kind: input, shape index: {}]
  %s2 = inlined_call_operand.vmem [shape: f32[16,128], index: 2, kind: input, shape index: {}]
  %s3 = inlined_call_operand.vmem [shape: f32[1,128], index: 3, kind: input, shape index: {}]
  %s4 = inlined_call_operand.vmem [shape: f32[32,128], index: 4, kind: input, shape index: {}]
  %s5 = inlined_call_operand.vmem [shape: f32[32,8], index: 5, kind: input, shape index: {}]
  %s6 = inlined_call_operand.vmem [shape: f32[1,8], index: 6, kind: input, shape index: {}]
  %s7 = inlined_call_operand.hbm [shape: f32[4,8], index: 7, kind: output, shape index: {}]
  %s8 = sld [smem:[#allocation0]]
  $region38: #{tpu_custom_call.1} parent=0
    _
  %s10 = ssub.s32 1, %s8
  %s11 = scalar_select 0, %s10, %s8
  $region1: #{tpu_custom_call.1} parent=0
    #allocation2 [shape = 'u8[2048]{0}', space=vmem, size = 0x800, scoped, tag = 'output window, operand 0, single buffered']
    #allocation3 [shape = 's32[1]{0}', space=sflag, size = 0x4, scoped, tag = 'scoped memory for tpu_custom_call.1']
    %12 = vsyncpa [#allocation3], 0
    // Predicated region
    $region2: #{tpu_custom_call.1} parent=1 // pred_check
      _
    $region3: #{tpu_custom_call.1} parent=1 // pred_check_branch
      %14 = sbr.rel (0) target = $region5
    $region4: #{tpu_custom_call.1} parent=1 // pred_region
      _
    $region5: #{tpu_custom_call.1} parent=1 // pred_fallthru
      _
    // Predicated region
    $region6: #{tpu_custom_call.1} parent=1 // pred_check
      _
    $region7: #{tpu_custom_call.1} parent=1 // pred_check_branch
      %16 = sbr.rel (0) target = $region9
    $region8: #{tpu_custom_call.1} parent=1 // pred_region
      _
    $region9: #{tpu_custom_call.1} parent=1 // pred_fallthru
      _
    // Predicated region
    $region10: #{tpu_custom_call.1} parent=1 // pred_check
      _
    $region11: #{tpu_custom_call.1} parent=1 // pred_check_branch
      %18 = sbr.rel (0) target = $region13
    $region12: #{tpu_custom_call.1} parent=1 // pred_region
      _
    $region13: #{tpu_custom_call.1} parent=1 // pred_fallthru
      _
    // Predicated region
    $region14: #{tpu_custom_call.1} parent=1 // pred_check
      _
    $region15: #{tpu_custom_call.1} parent=1 // pred_check_branch
      %20 = sbr.rel (0) target = $region17
    $region16: #{tpu_custom_call.1} parent=1 // pred_region
      _
    $region17: #{tpu_custom_call.1} parent=1 // pred_fallthru
      _
    // Predicated region
    $region18: #{tpu_custom_call.1} parent=1 // pred_check
      _
    $region19: #{tpu_custom_call.1} parent=1 // pred_check_branch
      %22 = sbr.rel (0) target = $region21
    $region20: #{tpu_custom_call.1} parent=1 // pred_region
      _
    $region21: #{tpu_custom_call.1} parent=1 // pred_fallthru
      _
    // Predicated region
    $region22: #{tpu_custom_call.1} parent=1 // pred_check
      _
    $region23: #{tpu_custom_call.1} parent=1 // pred_check_branch
      %24 = sbr.rel (0) target = $region25
    $region24: #{tpu_custom_call.1} parent=1 // pred_region
      _
    $region25: #{tpu_custom_call.1} parent=1 // pred_fallthru
      _
    // Predicated region
    $region26: #{tpu_custom_call.1} parent=1 // pred_check
      _
    $region27: #{tpu_custom_call.1} parent=1 // pred_check_branch
      %26 = sbr.rel (0) target = $region29
    $region28: #{tpu_custom_call.1} parent=1 // pred_region
      _
    $region29: #{tpu_custom_call.1} parent=1 // pred_fallthru
      _
    %v27 = vld [vmem:[%s0] sm:$0xff]
    %v28 = vld [vmem:[%s0 + $0x8] sm:$0xff]
    %v29 = vld [vmem:[%s0 + $0x10] sm:$0xff]
    %v30 = vld [vmem:[%s0 + $0x18] sm:$0xff]
    %v31 = vld [vmem:[%s1] sm:$0x1]
    %v33 = vlaneseq
    %v34 = vshrl.u32 %v33, 7
    %v35 = vsub.s32 0, %v34
    %v36 = vrot.slane %v31, %v35
    %v38 = vmul.f32 %v27, %v36
    %v39 = vmul.f32 %v28, %v36
    %v40 = vmul.f32 %v29, %v36
    %v41 = vmul.f32 %v30, %v36
    %vm42 = vcmask 130048
    %v43 = vsel %vm42, %v38, 0.0
    %44 = vadd.xlane.f32.xlu0 %v43
    %v45 = vpop.xlane.xlu0 %44
    %v46 = vsel %vm42, %v39, 0.0
    %47 = vadd.xlane.f32.xlu0 %v46
    %v48 = vpop.xlane.xlu0 %47
    %v49 = vsel %vm42, %v40, 0.0
    %50 = vadd.xlane.f32.xlu0 %v49
    %v51 = vpop.xlane.xlu0 %50
    %v52 = vsel %vm42, %v41, 0.0
    %53 = vadd.xlane.f32.xlu0 %v52
    %v54 = vpop.xlane.xlu0 %53
    %v59 = vlaneseq
    %v60 = vand.u32 %v59, 127
    %v61 = vlaneseq
    %v62 = vshrl.u32 %v61, 7
    %v63 = vsub.s32 %v60, %v62
    %v64 = vrot.slane %v45, %v63
    %v65 = vlaneseq
    %v66 = vshrl.u32 %v65, 7
    %v67 = vsub.s32 %v60, %v66
    %v68 = vrot.slane %v48, %v67
    %v69 = vlaneseq
    %v70 = vshrl.u32 %v69, 7
    %v71 = vsub.s32 %v60, %v70
    %v72 = vrot.slane %v51, %v71
    %v73 = vlaneseq
    %v74 = vshrl.u32 %v73, 7
    %v75 = vsub.s32 %v60, %v74
    %v76 = vrot.slane %v54, %v75
    %vm77 = vcmask 1041409
    %v78 = vsel %vm77, %v68, %v64
    %vm79 = vcmask 1042434
    %v80 = vsel %vm79, %v72, %v78
    %vm81 = vcmask 1043459
    %v82 = vsel %vm81, %v76, %v80
    %vm84 = vcmask 60416
    %v85 = vsel %vm84, %v82, -inf
    %86 = vmax.xlane.f32.xlu0 %v85
    %v87 = vpop.xlane.xlu0 %86
    %v89 = vlaneseq
    %v90 = vshrl.u32 %v89, 7
    %v91 = vsub.s32 0, %v90
    %v92 = vrot.slane %v87, %v91
    %v93 = vlaneseq
    %v94 = vshrl.u32 %v93, 7
    %v95 = vsub.s32 1, %v94
    %v96 = vrot.slane %v87, %v95
    %v97 = vlaneseq
    %v98 = vshrl.u32 %v97, 7
    %v99 = vsub.s32 2, %v98
    %v100 = vrot.slane %v87, %v99
    %v101 = vlaneseq
    %v102 = vshrl.u32 %v101, 7
    %v103 = vsub.s32 3, %v102
    %v104 = vrot.slane %v87, %v103
    %v109 = vsub.f32 %v45, %v92
    %v110 = vsub.f32 %v48, %v96
    %v111 = vsub.f32 %v51, %v100
    %v112 = vsub.f32 %v54, %v104
    %v113 = vmul.f32 %v109, 1.442695
    %v114 = vpow.pop %v113
    %v115 = vmul.f32 %v110, 1.442695
    %v116 = vpow.pop %v115
    %v117 = vmul.f32 %v111, 1.442695
    %v118 = vpow.pop %v117
    %v119 = vmul.f32 %v112, 1.442695
    %v120 = vpow.pop %v119
    %125 = vset.pattern.permute.xlu0 0
    %126 = vperm.xlu0 %125, %v114
    %v127 = vpop.permute.xlu0 %126
    %128 = vset.pattern.permute.xlu0 0
    %129 = vperm.xlu0 %128, %v116
    %v130 = vpop.permute.xlu0 %129
    %131 = vset.pattern.permute.xlu0 0
    %132 = vperm.xlu0 %131, %v118
    %v133 = vpop.permute.xlu0 %132
    %134 = vset.pattern.permute.xlu0 0
    %135 = vperm.xlu0 %134, %v120
    %v136 = vpop.permute.xlu0 %135
    %v137 = vlaneseq
    %v138 = vshrl.u32 %v137, 7
    %v139 = vsub.s32 %v60, %v138
    %v140 = vrot.slane %v127, %v139
    %v141 = vlaneseq
    %v142 = vshrl.u32 %v141, 7
    %v143 = vsub.s32 %v60, %v142
    %v144 = vrot.slane %v130, %v143
    %v145 = vlaneseq
    %v146 = vshrl.u32 %v145, 7
    %v147 = vsub.s32 %v60, %v146
    %v148 = vrot.slane %v133, %v147
    %v149 = vlaneseq
    %v150 = vshrl.u32 %v149, 7
    %v151 = vsub.s32 %v60, %v150
    %v152 = vrot.slane %v136, %v151
    %v153 = vsel %vm77, %v144, %v140
    %v154 = vsel %vm79, %v148, %v153
    %v155 = vsel %vm81, %v152, %v154
    %v157 = vsel %vm84, %v155, 0.0
    %158 = vadd.xlane.f32.xlu0 %v157
    %v159 = vpop.xlane.xlu0 %158
    %v161 = vlaneseq
    %v162 = vshrl.u32 %v161, 7
    %v163 = vsub.s32 0, %v162
    %v164 = vrot.slane %v159, %v163
    %v165 = vlaneseq
    %v166 = vshrl.u32 %v165, 7
    %v167 = vsub.s32 1, %v166
    %v168 = vrot.slane %v159, %v167
    %v169 = vlaneseq
    %v170 = vshrl.u32 %v169, 7
    %v171 = vsub.s32 2, %v170
    %v172 = vrot.slane %v159, %v171
    %v173 = vlaneseq
    %v174 = vshrl.u32 %v173, 7
    %v175 = vsub.s32 3, %v174
    %v176 = vrot.slane %v159, %v175
    %v181 = vrcp.pop %v164
    %v182 = vmul.f32 %v114, %v181
    %v183 = vrcp.pop %v168
    %v184 = vmul.f32 %v116, %v183
    %v185 = vrcp.pop %v172
    %v186 = vmul.f32 %v118, %v185
    %v187 = vrcp.pop %v176
    %v188 = vmul.f32 %v120, %v187
    %v189 = vld [vmem:[%s2] sm:$0xff]
    %v190 = vld [vmem:[%s2 + $0x8] sm:$0xff]
    %v192 = vsel %vm42, %v27, 0
    %v195 = vsel %vm42, %v28, 0
    %v198 = vsel %vm42, %v29, 0
    %v201 = vsel %vm42, %v30, 0
    %203 = vmatprep.subr.mxu0 0.0
    %204 = vmatpush1.msra.mxu0 0.0
    %205 = vmatprep.subr.mxu0 0.0
    %206 = vmatpush1.msra.mxu0 0.0
    %207 = vmatprep.subr.mxu0 0.0
    %208 = vmatpush1.msra.mxu0 0.0
    %209 = vmatprep.subr.mxu0 0.0
    %210 = vmatpush1.msra.mxu0 0.0
    %211 = vmatprep.subr.mxu0 0.0
    %212 = vmatpush1.msra.mxu0 0.0
    %213 = vmatprep.subr.mxu0 0.0
    %214 = vmatpush1.msra.mxu0 0.0
    %215 = vmatprep.subr.mxu0 0.0
    %216 = vmatpush1.msra.mxu0 0.0
    %217 = vmatprep.subr.mxu0 0.0
    %218 = vmatpush1.msra.mxu0 0.0
    %219 = vmatprep.subr.mxu0 0.0
    %220 = vmatpush1.msra.mxu0 0.0
    %221 = vmatprep.subr.mxu0 0.0
    %222 = vmatpush1.msra.mxu0 0.0
    %223 = vmatprep.subr.mxu0 0.0
    %224 = vmatpush1.msra.mxu0 0.0
    %225 = vmatprep.subr.mxu0 0.0
    %226 = vmatpush1.msra.mxu0 0.0
    %227 = vmatprep.subr.mxu0 0.0
    %228 = vmatpush1.msra.mxu0 0.0
    %229 = vmatprep.subr.mxu0 0.0
    %230 = vmatpush1.msra.mxu0 0.0
    %231 = vmatprep.subr.mxu0 0.0
    %232 = vmatpush1.msra.mxu0 %v190
    %233 = vmatprep.subr.mxu0 0.0
    %234 = vmatpush1.msra.mxu0 %v189
    %235 = vmatprep.subr.mxu0 0.0
    %236 = vmatpush2.msra.mxu0 0.0
    %237 = vmatprep.subr.mxu0 0.0
    %238 = vmatpush2.msra.mxu0 0.0
    %239 = vmatprep.subr.mxu0 0.0
    %240 = vmatpush2.msra.mxu0 0.0
    %241 = vmatprep.subr.mxu0 0.0
    %242 = vmatpush2.msra.mxu0 0.0
    %243 = vmatprep.subr.mxu0 0.0
    %244 = vmatpush2.msra.mxu0 0.0
    %245 = vmatprep.subr.mxu0 0.0
    %246 = vmatpush2.msra.mxu0 0.0
    %247 = vmatprep.subr.mxu0 0.0
    %248 = vmatpush2.msra.mxu0 0.0
    %249 = vmatprep.subr.mxu0 0.0
    %250 = vmatpush2.msra.mxu0 0.0
    %251 = vmatprep.subr.mxu0 0.0
    %252 = vmatpush2.msra.mxu0 0.0
    %253 = vmatprep.subr.mxu0 0.0
    %254 = vmatpush2.msra.mxu0 0.0
    %255 = vmatprep.subr.mxu0 0.0
    %256 = vmatpush2.msra.mxu0 0.0
    %257 = vmatprep.subr.mxu0 0.0
    %258 = vmatpush2.msra.mxu0 0.0
    %259 = vmatprep.subr.mxu0 0.0
    %260 = vmatpush2.msra.mxu0 0.0
    %261 = vmatprep.subr.mxu0 0.0
    %262 = vmatpush2.msra.mxu0 0.0
    %263 = vmatprep.subr.mxu0 0.0
    %264 = vmatpush2.msra.mxu0 0.0
    %265 = vmatprep.subr.mxu0 0.0
    %266 = vmatpush2.msra.mxu0 0.0
    %267 = vmatprep.mubr.f32.mxu0 0.0
    %268 = vmatmul.mubr.f32.gmra.mxu0 %v192
    %v269 = vpop.f32.mrf.mxu0
    %v270 = vadd.f32 0.0, %v269
    %v271 = vpop.f32.mrf.mxu0
    %272 = vmatprep.mubr.f32.mxu0 0.0
    %273 = vmatmul.mubr.f32.gmra.mxu0 %v195
    %v274 = vpop.f32.mrf.mxu0
    %v275 = vadd.f32 0.0, %v274
    %v276 = vpop.f32.mrf.mxu0
    %277 = vmatprep.mubr.f32.mxu0 0.0
    %278 = vmatmul.mubr.f32.gmra.mxu0 %v198
    %v279 = vpop.f32.mrf.mxu0
    %v280 = vadd.f32 0.0, %v279
    %v281 = vpop.f32.mrf.mxu0
    %282 = vmatprep.mubr.f32.mxu0 0.0
    %283 = vmatmul.mubr.f32.gmra.mxu0 %v201
    %v284 = vpop.f32.mrf.mxu0
    %v285 = vadd.f32 0.0, %v284
    %v286 = vpop.f32.mrf.mxu0
    %287 = vdwg.mxu0
    %289 = vset.pattern.permute.xlu0 0
    %290 = vperm.xlu0 %289, %v182
    %v291 = vpop.permute.xlu0 %290
    %294 = vset.pattern.permute.xlu0 0
    %295 = vperm.xlu0 %294, %v184
    %v296 = vpop.permute.xlu0 %295
    %299 = vset.pattern.permute.xlu0 0
    %300 = vperm.xlu0 %299, %v186
    %v301 = vpop.permute.xlu0 %300
    %304 = vset.pattern.permute.xlu0 0
    %305 = vperm.xlu0 %304, %v188
    %v306 = vpop.permute.xlu0 %305
    %v308 = vmul.f32 %v270, %v291
    %v309 = vmul.f32 %v275, %v296
    %v310 = vmul.f32 %v280, %v301
    %v311 = vmul.f32 %v285, %v306
    %v312 = vrot.slane %v308, 4
    %v313 = vadd.f32 %v308, %v312
    %v314 = vrot.slane %v313, 2
    %v315 = vadd.f32 %v313, %v314
    %v316 = vrot.slane %v315, 1
    %v317 = vadd.f32 %v315, %v316
    %v318 = vrot.slane %v309, 4
    %v319 = vadd.f32 %v309, %v318
    %v320 = vrot.slane %v319, 2
    %v321 = vadd.f32 %v319, %v320
    %v322 = vrot.slane %v321, 1
    %v323 = vadd.f32 %v321, %v322
    %v324 = vrot.slane %v310, 4
    %v325 = vadd.f32 %v310, %v324
    %v326 = vrot.slane %v325, 2
    %v327 = vadd.f32 %v325, %v326
    %v328 = vrot.slane %v327, 1
    %v329 = vadd.f32 %v327, %v328
    %v330 = vrot.slane %v311, 4
    %v331 = vadd.f32 %v311, %v330
    %v332 = vrot.slane %v331, 2
    %v333 = vadd.f32 %v331, %v332
    %v334 = vrot.slane %v333, 1
    %v335 = vadd.f32 %v333, %v334
    %v336 = vld [vmem:[%s3] sm:$0x1]
    %v338 = vlaneseq
    %v339 = vshrl.u32 %v338, 7
    %v340 = vsub.s32 0, %v339
    %v341 = vrot.slane %v336, %v340
    %v343 = vadd.f32 %v317, %v341
    %v344 = vadd.f32 %v323, %v341
    %v345 = vadd.f32 %v329, %v341
    %v346 = vadd.f32 %v335, %v341
    %v347 = vld [vmem:[%s4] sm:$0xff]
    %v348 = vld [vmem:[%s4 + $0x8] sm:$0xff]
    %v349 = vld [vmem:[%s4 + $0x10] sm:$0xff]
    %v350 = vld [vmem:[%s4 + $0x18] sm:$0xff]
    %v351 = vlaneseq
    %v352 = vshrl.u32 %v351, 7
    %vm353 = vcmask 261120
    %v355 = vsel %vm353, 0.0, 0
    %357 = vmatprep.subr.mxu0 0.0
    %358 = vmatpush1.msra.mxu0 0.0
    %359 = vmatprep.subr.mxu0 0.0
    %360 = vmatpush1.msra.mxu0 0.0
    %361 = vmatprep.subr.mxu0 0.0
    %362 = vmatpush1.msra.mxu0 0.0
    %363 = vmatprep.subr.mxu0 0.0
    %364 = vmatpush1.msra.mxu0 0.0
    %365 = vmatprep.subr.mxu0 0.0
    %366 = vmatpush1.msra.mxu0 0.0
    %367 = vmatprep.subr.mxu0 0.0
    %368 = vmatpush1.msra.mxu0 0.0
    %369 = vmatprep.subr.mxu0 0.0
    %370 = vmatpush1.msra.mxu0 0.0
    %371 = vmatprep.subr.mxu0 0.0
    %372 = vmatpush1.msra.mxu0 0.0
    %373 = vmatprep.subr.mxu0 0.0
    %374 = vmatpush1.msra.mxu0 0.0
    %375 = vmatprep.subr.mxu0 0.0
    %376 = vmatpush1.msra.mxu0 0.0
    %377 = vmatprep.subr.mxu0 0.0
    %378 = vmatpush1.msra.mxu0 0.0
    %379 = vmatprep.subr.mxu0 0.0
    %380 = vmatpush1.msra.mxu0 0.0
    %381 = vmatprep.subr.mxu0 0.0
    %382 = vmatpush1.msra.mxu0 %v350
    %383 = vmatprep.subr.mxu0 0.0
    %384 = vmatpush1.msra.mxu0 %v349
    %385 = vmatprep.subr.mxu0 0.0
    %386 = vmatpush1.msra.mxu0 %v348
    %387 = vmatprep.subr.mxu0 0.0
    %388 = vmatpush1.msra.mxu0 %v347
    %389 = vmatprep.subr.mxu0 0.0
    %390 = vmatpush2.msra.mxu0 0.0
    %391 = vmatprep.subr.mxu0 0.0
    %392 = vmatpush2.msra.mxu0 0.0
    %393 = vmatprep.subr.mxu0 0.0
    %394 = vmatpush2.msra.mxu0 0.0
    %395 = vmatprep.subr.mxu0 0.0
    %396 = vmatpush2.msra.mxu0 0.0
    %397 = vmatprep.subr.mxu0 0.0
    %398 = vmatpush2.msra.mxu0 0.0
    %399 = vmatprep.subr.mxu0 0.0
    %400 = vmatpush2.msra.mxu0 0.0
    %401 = vmatprep.subr.mxu0 0.0
    %402 = vmatpush2.msra.mxu0 0.0
    %403 = vmatprep.subr.mxu0 0.0
    %404 = vmatpush2.msra.mxu0 0.0
    %405 = vmatprep.subr.mxu0 0.0
    %406 = vmatpush2.msra.mxu0 0.0
    %407 = vmatprep.subr.mxu0 0.0
    %408 = vmatpush2.msra.mxu0 0.0
    %409 = vmatprep.subr.mxu0 0.0
    %410 = vmatpush2.msra.mxu0 0.0
    %411 = vmatprep.subr.mxu0 0.0
    %412 = vmatpush2.msra.mxu0 0.0
    %413 = vmatprep.subr.mxu0 0.0
    %414 = vmatpush2.msra.mxu0 0.0
    %415 = vmatprep.subr.mxu0 0.0
    %416 = vmatpush2.msra.mxu0 0.0
    %417 = vmatprep.subr.mxu0 0.0
    %418 = vmatpush2.msra.mxu0 0.0
    %419 = vmatprep.subr.mxu0 0.0
    %420 = vmatpush2.msra.mxu0 0.0
    %421 = vmatprep.mubr.f32.mxu0 0.0
    %422 = vmatmul.mubr.f32.gmra.mxu0 %v355
    %v423 = vpop.f32.mrf.mxu0
    %v424 = vadd.f32 0.0, %v423
    %v425 = vpop.f32.mrf.mxu0
    %426 = vdwg.mxu0
    %v427 = vadd.f32 %v343, %v424
    %v428 = vmul.f32 %v427, 0.5
    %v429 = vtanh.pop %v428
    %v430 = vadd.f32 %v429, 1.0
    %v431 = vmul.f32 %v430, 0.5
    %v432 = vtanh.pop %v427
    %v433 = vmul.f32 %v431, 0.0
    %435 = vrot.lane.b32.xlu0 %v432, 64
    %v436 = vpop.permute.xlu0 %435
    %v438 = vmul.f32 %v431, %v436
    %440 = vrot.lane.b32.xlu0 %v438, 32
    %v441 = vpop.permute.xlu0 %440
    %v443 = vadd.f32 %v433, %v441
    %v444 = vtanh.pop %v443
    %446 = vrot.lane.b32.xlu0 %v444, 64
    %v447 = vpop.permute.xlu0 %446
    %v449 = vmul.f32 %v431, %v447
    %vm450 = vcmp.eq.s32.totalorder %v352, 0
    %v451 = vlaneseq
    %v452 = vshrl.u32 %v451, 7
    %v453 = vsub.s32 0, %v452
    %v454 = vrot.slane %v449, %v453
    %v455 = vsel %vm450, %v454, 0.0
    %457 = vrot.lane.b32.xlu0 %v449, 32
    %v458 = vpop.permute.xlu0 %457
    %v459 = vsel %vm353, %v458, 0
    %461 = vmatprep.subr.mxu0 0.0
    %462 = vmatpush1.msra.mxu0 0.0
    %463 = vmatprep.subr.mxu0 0.0
    %464 = vmatpush1.msra.mxu0 0.0
    %465 = vmatprep.subr.mxu0 0.0
    %466 = vmatpush1.msra.mxu0 0.0
    %467 = vmatprep.subr.mxu0 0.0
    %468 = vmatpush1.msra.mxu0 0.0
    %469 = vmatprep.subr.mxu0 0.0
    %470 = vmatpush1.msra.mxu0 0.0
    %471 = vmatprep.subr.mxu0 0.0
    %472 = vmatpush1.msra.mxu0 0.0
    %473 = vmatprep.subr.mxu0 0.0
    %474 = vmatpush1.msra.mxu0 0.0
    %475 = vmatprep.subr.mxu0 0.0
    %476 = vmatpush1.msra.mxu0 0.0
    %477 = vmatprep.subr.mxu0 0.0
    %478 = vmatpush1.msra.mxu0 0.0
    %479 = vmatprep.subr.mxu0 0.0
    %480 = vmatpush1.msra.mxu0 0.0
    %481 = vmatprep.subr.mxu0 0.0
    %482 = vmatpush1.msra.mxu0 0.0
    %483 = vmatprep.subr.mxu0 0.0
    %484 = vmatpush1.msra.mxu0 0.0
    %485 = vmatprep.subr.mxu0 0.0
    %486 = vmatpush1.msra.mxu0 %v350
    %487 = vmatprep.subr.mxu0 0.0
    %488 = vmatpush1.msra.mxu0 %v349
    %489 = vmatprep.subr.mxu0 0.0
    %490 = vmatpush1.msra.mxu0 %v348
    %491 = vmatprep.subr.mxu0 0.0
    %492 = vmatpush1.msra.mxu0 %v347
    %493 = vmatprep.subr.mxu0 0.0
    %494 = vmatpush2.msra.mxu0 0.0
    %495 = vmatprep.subr.mxu0 0.0
    %496 = vmatpush2.msra.mxu0 0.0
    %497 = vmatprep.subr.mxu0 0.0
    %498 = vmatpush2.msra.mxu0 0.0
    %499 = vmatprep.subr.mxu0 0.0
    %500 = vmatpush2.msra.mxu0 0.0
    %501 = vmatprep.subr.mxu0 0.0
    %502 = vmatpush2.msra.mxu0 0.0
    %503 = vmatprep.subr.mxu0 0.0
    %504 = vmatpush2.msra.mxu0 0.0
    %505 = vmatprep.subr.mxu0 0.0
    %506 = vmatpush2.msra.mxu0 0.0
    %507 = vmatprep.subr.mxu0 0.0
    %508 = vmatpush2.msra.mxu0 0.0
    %509 = vmatprep.subr.mxu0 0.0
    %510 = vmatpush2.msra.mxu0 0.0
    %511 = vmatprep.subr.mxu0 0.0
    %512 = vmatpush2.msra.mxu0 0.0
    %513 = vmatprep.subr.mxu0 0.0
    %514 = vmatpush2.msra.mxu0 0.0
    %515 = vmatprep.subr.mxu0 0.0
    %516 = vmatpush2.msra.mxu0 0.0
    %517 = vmatprep.subr.mxu0 0.0
    %518 = vmatpush2.msra.mxu0 0.0
    %519 = vmatprep.subr.mxu0 0.0
    %520 = vmatpush2.msra.mxu0 0.0
    %521 = vmatprep.subr.mxu0 0.0
    %522 = vmatpush2.msra.mxu0 0.0
    %523 = vmatprep.subr.mxu0 0.0
    %524 = vmatpush2.msra.mxu0 0.0
    %525 = vmatprep.mubr.f32.mxu0 0.0
    %526 = vmatmul.mubr.f32.gmra.mxu0 %v459
    %v527 = vpop.f32.mrf.mxu0
    %v528 = vadd.f32 0.0, %v527
    %v529 = vpop.f32.mrf.mxu0
    %530 = vdwg.mxu0
    %v531 = vadd.f32 %v344, %v528
    %v532 = vmul.f32 %v531, 0.5
    %v533 = vtanh.pop %v532
    %v534 = vadd.f32 %v533, 1.0
    %v535 = vmul.f32 %v534, 0.5
    %v536 = vtanh.pop %v531
    %v537 = vmul.f32 %v535, %v443
    %539 = vrot.lane.b32.xlu0 %v536, 64
    %v540 = vpop.permute.xlu0 %539
    %v542 = vmul.f32 %v535, %v540
    %544 = vrot.lane.b32.xlu0 %v542, 32
    %v545 = vpop.permute.xlu0 %544
    %v547 = vadd.f32 %v537, %v545
    %v548 = vtanh.pop %v547
    %550 = vrot.lane.b32.xlu0 %v548, 64
    %v551 = vpop.permute.xlu0 %550
    %v553 = vmul.f32 %v535, %v551
    %vm554 = vcmp.eq.s32.totalorder %v352, 1
    %v555 = vlaneseq
    %v556 = vshrl.u32 %v555, 7
    %v557 = vsub.s32 0, %v556
    %v558 = vrot.slane %v553, %v557
    %v559 = vsel %vm554, %v558, %v455
    %561 = vrot.lane.b32.xlu0 %v553, 32
    %v562 = vpop.permute.xlu0 %561
    %v563 = vsel %vm353, %v562, 0
    %565 = vmatprep.subr.mxu0 0.0
    %566 = vmatpush1.msra.mxu0 0.0
    %567 = vmatprep.subr.mxu0 0.0
    %568 = vmatpush1.msra.mxu0 0.0
    %569 = vmatprep.subr.mxu0 0.0
    %570 = vmatpush1.msra.mxu0 0.0
    %571 = vmatprep.subr.mxu0 0.0
    %572 = vmatpush1.msra.mxu0 0.0
    %573 = vmatprep.subr.mxu0 0.0
    %574 = vmatpush1.msra.mxu0 0.0
    %575 = vmatprep.subr.mxu0 0.0
    %576 = vmatpush1.msra.mxu0 0.0
    %577 = vmatprep.subr.mxu0 0.0
    %578 = vmatpush1.msra.mxu0 0.0
    %579 = vmatprep.subr.mxu0 0.0
    %580 = vmatpush1.msra.mxu0 0.0
    %581 = vmatprep.subr.mxu0 0.0
    %582 = vmatpush1.msra.mxu0 0.0
    %583 = vmatprep.subr.mxu0 0.0
    %584 = vmatpush1.msra.mxu0 0.0
    %585 = vmatprep.subr.mxu0 0.0
    %586 = vmatpush1.msra.mxu0 0.0
    %587 = vmatprep.subr.mxu0 0.0
    %588 = vmatpush1.msra.mxu0 0.0
    %589 = vmatprep.subr.mxu0 0.0
    %590 = vmatpush1.msra.mxu0 %v350
    %591 = vmatprep.subr.mxu0 0.0
    %592 = vmatpush1.msra.mxu0 %v349
    %593 = vmatprep.subr.mxu0 0.0
    %594 = vmatpush1.msra.mxu0 %v348
    %595 = vmatprep.subr.mxu0 0.0
    %596 = vmatpush1.msra.mxu0 %v347
    %597 = vmatprep.subr.mxu0 0.0
    %598 = vmatpush2.msra.mxu0 0.0
    %599 = vmatprep.subr.mxu0 0.0
    %600 = vmatpush2.msra.mxu0 0.0
    %601 = vmatprep.subr.mxu0 0.0
    %602 = vmatpush2.msra.mxu0 0.0
    %603 = vmatprep.subr.mxu0 0.0
    %604 = vmatpush2.msra.mxu0 0.0
    %605 = vmatprep.subr.mxu0 0.0
    %606 = vmatpush2.msra.mxu0 0.0
    %607 = vmatprep.subr.mxu0 0.0
    %608 = vmatpush2.msra.mxu0 0.0
    %609 = vmatprep.subr.mxu0 0.0
    %610 = vmatpush2.msra.mxu0 0.0
    %611 = vmatprep.subr.mxu0 0.0
    %612 = vmatpush2.msra.mxu0 0.0
    %613 = vmatprep.subr.mxu0 0.0
    %614 = vmatpush2.msra.mxu0 0.0
    %615 = vmatprep.subr.mxu0 0.0
    %616 = vmatpush2.msra.mxu0 0.0
    %617 = vmatprep.subr.mxu0 0.0
    %618 = vmatpush2.msra.mxu0 0.0
    %619 = vmatprep.subr.mxu0 0.0
    %620 = vmatpush2.msra.mxu0 0.0
    %621 = vmatprep.subr.mxu0 0.0
    %622 = vmatpush2.msra.mxu0 0.0
    %623 = vmatprep.subr.mxu0 0.0
    %624 = vmatpush2.msra.mxu0 0.0
    %625 = vmatprep.subr.mxu0 0.0
    %626 = vmatpush2.msra.mxu0 0.0
    %627 = vmatprep.subr.mxu0 0.0
    %628 = vmatpush2.msra.mxu0 0.0
    %629 = vmatprep.mubr.f32.mxu0 0.0
    %630 = vmatmul.mubr.f32.gmra.mxu0 %v563
    %v631 = vpop.f32.mrf.mxu0
    %v632 = vadd.f32 0.0, %v631
    %v633 = vpop.f32.mrf.mxu0
    %634 = vdwg.mxu0
    %v635 = vadd.f32 %v345, %v632
    %v636 = vmul.f32 %v635, 0.5
    %v637 = vtanh.pop %v636
    %v638 = vadd.f32 %v637, 1.0
    %v639 = vmul.f32 %v638, 0.5
    %v640 = vtanh.pop %v635
    %v641 = vmul.f32 %v639, %v547
    %643 = vrot.lane.b32.xlu0 %v640, 64
    %v644 = vpop.permute.xlu0 %643
    %v646 = vmul.f32 %v639, %v644
    %648 = vrot.lane.b32.xlu0 %v646, 32
    %v649 = vpop.permute.xlu0 %648
    %v651 = vadd.f32 %v641, %v649
    %v652 = vtanh.pop %v651
    %654 = vrot.lane.b32.xlu0 %v652, 64
    %v655 = vpop.permute.xlu0 %654
    %v657 = vmul.f32 %v639, %v655
    %vm658 = vcmp.eq.s32.totalorder %v352, 2
    %v659 = vlaneseq
    %v660 = vshrl.u32 %v659, 7
    %v661 = vsub.s32 0, %v660
    %v662 = vrot.slane %v657, %v661
    %v663 = vsel %vm658, %v662, %v559
    %665 = vrot.lane.b32.xlu0 %v657, 32
    %v666 = vpop.permute.xlu0 %665
    %v667 = vsel %vm353, %v666, 0
    %669 = vmatprep.subr.mxu0 0.0
    %670 = vmatpush1.msra.mxu0 0.0
    %671 = vmatprep.subr.mxu0 0.0
    %672 = vmatpush1.msra.mxu0 0.0
    %673 = vmatprep.subr.mxu0 0.0
    %674 = vmatpush1.msra.mxu0 0.0
    %675 = vmatprep.subr.mxu0 0.0
    %676 = vmatpush1.msra.mxu0 0.0
    %677 = vmatprep.subr.mxu0 0.0
    %678 = vmatpush1.msra.mxu0 0.0
    %679 = vmatprep.subr.mxu0 0.0
    %680 = vmatpush1.msra.mxu0 0.0
    %681 = vmatprep.subr.mxu0 0.0
    %682 = vmatpush1.msra.mxu0 0.0
    %683 = vmatprep.subr.mxu0 0.0
    %684 = vmatpush1.msra.mxu0 0.0
    %685 = vmatprep.subr.mxu0 0.0
    %686 = vmatpush1.msra.mxu0 0.0
    %687 = vmatprep.subr.mxu0 0.0
    %688 = vmatpush1.msra.mxu0 0.0
    %689 = vmatprep.subr.mxu0 0.0
    %690 = vmatpush1.msra.mxu0 0.0
    %691 = vmatprep.subr.mxu0 0.0
    %692 = vmatpush1.msra.mxu0 0.0
    %693 = vmatprep.subr.mxu0 0.0
    %694 = vmatpush1.msra.mxu0 %v350
    %695 = vmatprep.subr.mxu0 0.0
    %696 = vmatpush1.msra.mxu0 %v349
    %697 = vmatprep.subr.mxu0 0.0
    %698 = vmatpush1.msra.mxu0 %v348
    %699 = vmatprep.subr.mxu0 0.0
    %700 = vmatpush1.msra.mxu0 %v347
    %701 = vmatprep.subr.mxu0 0.0
    %702 = vmatpush2.msra.mxu0 0.0
    %703 = vmatprep.subr.mxu0 0.0
    %704 = vmatpush2.msra.mxu0 0.0
    %705 = vmatprep.subr.mxu0 0.0
    %706 = vmatpush2.msra.mxu0 0.0
    %707 = vmatprep.subr.mxu0 0.0
    %708 = vmatpush2.msra.mxu0 0.0
    %709 = vmatprep.subr.mxu0 0.0
    %710 = vmatpush2.msra.mxu0 0.0
    %711 = vmatprep.subr.mxu0 0.0
    %712 = vmatpush2.msra.mxu0 0.0
    %713 = vmatprep.subr.mxu0 0.0
    %714 = vmatpush2.msra.mxu0 0.0
    %715 = vmatprep.subr.mxu0 0.0
    %716 = vmatpush2.msra.mxu0 0.0
    %717 = vmatprep.subr.mxu0 0.0
    %718 = vmatpush2.msra.mxu0 0.0
    %719 = vmatprep.subr.mxu0 0.0
    %720 = vmatpush2.msra.mxu0 0.0
    %721 = vmatprep.subr.mxu0 0.0
    %722 = vmatpush2.msra.mxu0 0.0
    %723 = vmatprep.subr.mxu0 0.0
    %724 = vmatpush2.msra.mxu0 0.0
    %725 = vmatprep.subr.mxu0 0.0
    %726 = vmatpush2.msra.mxu0 0.0
    %727 = vmatprep.subr.mxu0 0.0
    %728 = vmatpush2.msra.mxu0 0.0
    %729 = vmatprep.subr.mxu0 0.0
    %730 = vmatpush2.msra.mxu0 0.0
    %731 = vmatprep.subr.mxu0 0.0
    %732 = vmatpush2.msra.mxu0 0.0
    %733 = vmatprep.mubr.f32.mxu0 0.0
    %734 = vmatmul.mubr.f32.gmra.mxu0 %v667
    %v735 = vpop.f32.mrf.mxu0
    %v736 = vadd.f32 0.0, %v735
    %v737 = vpop.f32.mrf.mxu0
    %738 = vdwg.mxu0
    %v739 = vadd.f32 %v346, %v736
    %v740 = vmul.f32 %v739, 0.5
    %v741 = vtanh.pop %v740
    %v742 = vadd.f32 %v741, 1.0
    %v743 = vmul.f32 %v742, 0.5
    %v744 = vtanh.pop %v739
    %v745 = vmul.f32 %v743, %v651
    %747 = vrot.lane.b32.xlu0 %v744, 64
    %v748 = vpop.permute.xlu0 %747
    %v750 = vmul.f32 %v743, %v748
    %752 = vrot.lane.b32.xlu0 %v750, 32
    %v753 = vpop.permute.xlu0 %752
    %v755 = vadd.f32 %v745, %v753
    %v756 = vtanh.pop %v755
    %758 = vrot.lane.b32.xlu0 %v756, 64
    %v759 = vpop.permute.xlu0 %758
    %v761 = vmul.f32 %v743, %v759
    %vm762 = vcmp.eq.s32.totalorder %v352, 3
    %v763 = vlaneseq
    %v764 = vshrl.u32 %v763, 7
    %v765 = vsub.s32 0, %v764
    %v766 = vrot.slane %v761, %v765
    %v767 = vsel %vm762, %v766, %v663
    %v768 = vld [vmem:[%s5] sm:$0xff]
    %v769 = vld [vmem:[%s5 + $0x8] sm:$0xff]
    %v770 = vld [vmem:[%s5 + $0x10] sm:$0xff]
    %v771 = vld [vmem:[%s5 + $0x18] sm:$0xff]
    %v772 = vld [vmem:[%s6] sm:$0x1]
    %v774 = vlaneseq
    %v775 = vshrl.u32 %v774, 7
    %v776 = vsub.s32 0, %v775
    %v777 = vrot.slane %v772, %v776
    %780 = vrot.lane.b32.xlu0 %v767, 32
    %v781 = vpop.permute.xlu0 %780
    %v782 = vsel %vm353, %v781, 0
    %784 = vmatprep.subr.mxu0 0.0
    %785 = vmatpush1.msra.mxu0 0.0
    %786 = vmatprep.subr.mxu0 0.0
    %787 = vmatpush1.msra.mxu0 0.0
    %788 = vmatprep.subr.mxu0 0.0
    %789 = vmatpush1.msra.mxu0 0.0
    %790 = vmatprep.subr.mxu0 0.0
    %791 = vmatpush1.msra.mxu0 0.0
    %792 = vmatprep.subr.mxu0 0.0
    %793 = vmatpush1.msra.mxu0 0.0
    %794 = vmatprep.subr.mxu0 0.0
    %795 = vmatpush1.msra.mxu0 0.0
    %796 = vmatprep.subr.mxu0 0.0
    %797 = vmatpush1.msra.mxu0 0.0
    %798 = vmatprep.subr.mxu0 0.0
    %799 = vmatpush1.msra.mxu0 0.0
    %800 = vmatprep.subr.mxu0 0.0
    %801 = vmatpush1.msra.mxu0 0.0
    %802 = vmatprep.subr.mxu0 0.0
    %803 = vmatpush1.msra.mxu0 0.0
    %804 = vmatprep.subr.mxu0 0.0
    %805 = vmatpush1.msra.mxu0 0.0
    %806 = vmatprep.subr.mxu0 0.0
    %807 = vmatpush1.msra.mxu0 0.0
    %808 = vmatprep.subr.mxu0 0.0
    %809 = vmatpush1.msra.mxu0 %v771
    %810 = vmatprep.subr.mxu0 0.0
    %811 = vmatpush1.msra.mxu0 %v770
    %812 = vmatprep.subr.mxu0 0.0
    %813 = vmatpush1.msra.mxu0 %v769
    %814 = vmatprep.subr.mxu0 0.0
    %815 = vmatpush1.msra.mxu0 %v768
    %816 = vmatprep.subr.mxu0 0.0
    %817 = vmatpush2.msra.mxu0 0.0
    %818 = vmatprep.subr.mxu0 0.0
    %819 = vmatpush2.msra.mxu0 0.0
    %820 = vmatprep.subr.mxu0 0.0
    %821 = vmatpush2.msra.mxu0 0.0
    %822 = vmatprep.subr.mxu0 0.0
    %823 = vmatpush2.msra.mxu0 0.0
    %824 = vmatprep.subr.mxu0 0.0
    %825 = vmatpush2.msra.mxu0 0.0
    %826 = vmatprep.subr.mxu0 0.0
    %827 = vmatpush2.msra.mxu0 0.0
    %828 = vmatprep.subr.mxu0 0.0
    %829 = vmatpush2.msra.mxu0 0.0
    %830 = vmatprep.subr.mxu0 0.0
    %831 = vmatpush2.msra.mxu0 0.0
    %832 = vmatprep.subr.mxu0 0.0
    %833 = vmatpush2.msra.mxu0 0.0
    %834 = vmatprep.subr.mxu0 0.0
    %835 = vmatpush2.msra.mxu0 0.0
    %836 = vmatprep.subr.mxu0 0.0
    %837 = vmatpush2.msra.mxu0 0.0
    %838 = vmatprep.subr.mxu0 0.0
    %839 = vmatpush2.msra.mxu0 0.0
    %840 = vmatprep.subr.mxu0 0.0
    %841 = vmatpush2.msra.mxu0 0.0
    %842 = vmatprep.subr.mxu0 0.0
    %843 = vmatpush2.msra.mxu0 0.0
    %844 = vmatprep.subr.mxu0 0.0
    %845 = vmatpush2.msra.mxu0 0.0
    %846 = vmatprep.subr.mxu0 0.0
    %847 = vmatpush2.msra.mxu0 0.0
    %848 = vmatprep.mubr.f32.mxu0 0.0
    %849 = vmatmul.mubr.f32.gmra.mxu0 %v782
    %v850 = vpop.f32.mrf.mxu0
    %v851 = vadd.f32 %v777, %v850
    %v852 = vpop.f32.mrf.mxu0
    %853 = vdwg.mxu0
    %854 = vst.msk [vmem:[#allocation2] sm:$0xf] %vm84, %v851
    // Predicated region
    $region30: #{tpu_custom_call.1} parent=1 // pred_check
      _
    $region31: #{tpu_custom_call.1} parent=1 // pred_check_branch
      %856 = sbr.rel (0) target = $region33
    $region32: #{tpu_custom_call.1} parent=1 // pred_region
      %s858 = ssub.s32 64, 64
      %859 = vsyncadd [#allocation3], %s858
      %s861 = sshll.u32 [#allocation2], 4
      %s862 = int_to_ptr.vmem [resolvable:$true] %s861
      %864 = dma.vmem_to_hbm [thread:$0]  %s862, 64, %s7, [#allocation3]
    $region33: #{tpu_custom_call.1} parent=1 // pred_fallthru
      _
    // Predicated region
    $region34: #{tpu_custom_call.1} parent=1 // pred_check
      _
    $region35: #{tpu_custom_call.1} parent=1 // pred_check_branch
      %866 = sbr.rel (0) target = $region37
    $region36: #{tpu_custom_call.1} parent=1 // pred_region
      %867 = dma.done [#allocation3], 64
    $region37: #{tpu_custom_call.1} parent=1 // pred_fallthru
      _
    %868 = vsyncpa [#allocation3], 1

</llo_original>
